<compile_context>
chip_gen: v6e
topology: v6e:2x2x1
jax: 0.10.0
libtpu: 0.0.40
codegen_flags: <defaults>
</compile_context>

<pallas_src>
import functools

import jax
import jax.numpy as jnp
from jax import lax
from jax.experimental import pallas as pl
from jax.experimental.pallas import tpu as pltpu

LANES = 128  # lane width: pad all output-feature dims to this


def _hash_bits_u32(shape, salt_u32):
    """Stateless counter-based PRNG: uniform uint32 bits of `shape`."""
    r = lax.broadcasted_iota(jnp.uint32, shape, 0)
    c = lax.broadcasted_iota(jnp.uint32, shape, 1)
    x = r * jnp.uint32(0x9E3779B1) + c * jnp.uint32(0x85EBCA77) + salt_u32
    # murmur3-style finalizer (good avalanche, all VPU int ops)
    x = x ^ (x >> 16)
    x = x * jnp.uint32(0x7FEB352D)
    x = x ^ (x >> 15)
    x = x * jnp.uint32(0x846CA68B)
    x = x ^ (x >> 16)
    return x


def _fused_mlp_kernel(seed_ref, x_ref, w1_ref, b1_ref, w2_ref, b2_ref,
                      w3_ref, b3_ref, o_ref, *, dropout_rate):
    """Fused fc1+dropout+relu -> fc2+dropout+relu -> fc3 for one MC sample.

    seed_ref : SMEM (1,) int32 (scalar-prefetch)
    x_ref    : VMEM (B, Din)          unpadded input
    w*_ref   : VMEM (in_pad, 128)     pre-transposed, zero-padded weights
    b*_ref   : VMEM (1, 128)          zero-padded bias
    o_ref    : VMEM (1, B, 128)       lane-dense output slab for this sample
    """
    sample = pl.program_id(0)
    base = seed_ref[0] + sample * jnp.int32(0x3779)  # per-sample salt (int32)

    keep_p = 1.0 - dropout_rate
    if dropout_rate > 0.0:
        thresh = jnp.uint32(min(int(round(keep_p * float(2 ** 32))), 2 ** 32 - 1))
        scale = 1.0 / keep_p

    def dropout(h, layer_idx):
        if dropout_rate <= 0.0:
            return h
        salt = (base + jnp.int32(layer_idx * 1000003)).astype(jnp.uint32)
        bits = _hash_bits_u32(h.shape, salt)
        keep = bits < thresh                      # keep with prob (1 - p)
        return jnp.where(keep, h * scale, 0.0)    # survivors scaled by 1/(1-p)

    x = x_ref[...]

    # fc1 -> dropout (not last layer) -> relu1
    h = jnp.dot(x, w1_ref[...], preferred_element_type=jnp.float32) + b1_ref[...]
    h = dropout(h, 0)
    h = jnp.maximum(h, 0.0)

    # fc2 -> dropout (not last layer) -> relu2
    h = jnp.dot(h, w2_ref[...], preferred_element_type=jnp.float32) + b2_ref[...]
    h = dropout(h, 1)
    h = jnp.maximum(h, 0.0)

    # fc3 == last_layer_name -> NO dropout, no relu
    y = jnp.dot(h, w3_ref[...], preferred_element_type=jnp.float32) + b3_ref[...]

    o_ref[...] = y.reshape(o_ref.shape).astype(o_ref.dtype)


def prepare_params(params):
    """One-time prep: transpose PyTorch (out,in) weights to (in,out), zero-pad
    feature dims to 128 lanes.  Do NOT call per forward pass."""
    (w1, b1), (w2, b2), (w3, b3) = params

    def prep(w, b, pad_in, pad_out):
        w_t = jnp.transpose(w).astype(jnp.float32)          # (in, out)
        din, dout = w_t.shape
        w_p = jnp.zeros((pad_in, pad_out), jnp.float32).at[:din, :dout].set(w_t)
        b_p = jnp.zeros((1, pad_out), jnp.float32).at[0, :dout].set(
            b.astype(jnp.float32))
        return w_p, b_p

    d_in = w1.shape[1]
    w1p, b1p = prep(w1, b1, d_in, LANES)     # x stays at its native Din
    w2p, b2p = prep(w2, b2, LANES, LANES)    # hidden dims padded to 128
    w3p, b3p = prep(w3, b3, LANES, LANES)
    return (w1p, b1p, w2p, b2p, w3p, b3p), int(w3.shape[0])


def mc_dropout_forward(x, prepared, d_out, *, dropout_rate=0.5, seed=0,
                       num_samples=1):
    """Run `num_samples` stochastic forward passes in one fused, gridded kernel.

    Returns (num_samples, batch, d_out).  Each grid step is one MC sample with
    an independent dropout mask (seed mixed with pl.program_id inside).
    """
    batch, d_in = x.shape
    w1p, b1p, w2p, b2p, w3p, b3p = prepared
    seed_arr = jnp.asarray([seed], dtype=jnp.int32)

    kernel = functools.partial(_fused_mlp_kernel,
                               dropout_rate=float(dropout_rate))

    out = pl.pallas_call(
        kernel,
        out_shape=jax.ShapeDtypeStruct((num_samples, batch, LANES), jnp.float32),
        grid_spec=pltpu.PrefetchScalarGridSpec(
            num_scalar_prefetch=1,               # seed -> SMEM
            grid=(num_samples,),
            in_specs=[
                pl.BlockSpec((batch, d_in), lambda s, sd: (0, 0)),   # x (resident)
                pl.BlockSpec(w1p.shape, lambda s, sd: (0, 0)),       # weights stay
                pl.BlockSpec(b1p.shape, lambda s, sd: (0, 0)),       # resident across
                pl.BlockSpec(w2p.shape, lambda s, sd: (0, 0)),       # all samples
                pl.BlockSpec(b2p.shape, lambda s, sd: (0, 0)),
                pl.BlockSpec(w3p.shape, lambda s, sd: (0, 0)),
                pl.BlockSpec(b3p.shape, lambda s, sd: (0, 0)),
            ],
            out_specs=pl.BlockSpec((1, batch, LANES), lambda s, sd: (s, 0, 0)),
        ),
        compiler_params=pltpu.CompilerParams(
            dimension_semantics=("parallel",)),   # v7x: samples across 2 TCs
    )(seed_arr, x, w1p, b1p, w2p, b2p, w3p, b3p)

    return out[:, :, :d_out]   # drop lane padding


def dropout_wrapper_forward(x, prepared, d_out, *, dropout_rate=0.5, seed=0):
    """Single stochastic forward pass matching DropoutWrapper.forward(x)."""
    return mc_dropout_forward(x, prepared, d_out, dropout_rate=dropout_rate,
                              seed=seed, num_samples=1)[0]


if __name__ == "__main__":
    key = jax.random.PRNGKey(0)
    k_x, k1, k2, k3, kb1, kb2, kb3 = jax.random.split(key, 7)

    batch, d_in, d_hidden, d_out = 8, 32, 64, 4

    # Deterministic synthetic parameters (PyTorch Linear layout: (out, in)).
    w1 = jax.random.normal(k1, (d_hidden, d_in), jnp.float32) * 0.1
    b1 = jax.random.normal(kb1, (d_hidden,), jnp.float32) * 0.01
    w2 = jax.random.normal(k2, (d_hidden, d_hidden), jnp.float32) * 0.1
    b2 = jax.random.normal(kb2, (d_hidden,), jnp.float32) * 0.01
    w3 = jax.random.normal(k3, (d_out, d_hidden), jnp.float32) * 0.1
    b3 = jax.random.normal(kb3, (d_out,), jnp.float32) * 0.01
    params = ((w1, b1), (w2, b2), (w3, b3))

    prepared, d_out_real = prepare_params(params)   # transpose + pad ONCE

    x = jax.random.normal(k_x, (batch, d_in), jnp.float32)

    # --- correctness check (dropout disabled -> must match pure-JAX MLP) ----
    y_nodrop = dropout_wrapper_forward(x, prepared, d_out_real,
                                       dropout_rate=0.0, seed=0)
    y_nodrop = jax.block_until_ready(y_nodrop)
    h_ref = jnp.maximum(x @ w1.T + b1, 0.0)
    h_ref = jnp.maximum(h_ref @ w2.T + b2, 0.0)
    y_ref = h_ref @ w3.T + b3
    assert y_nodrop.shape == (batch, d_out), y_nodrop.shape
    assert bool(jnp.allclose(y_nodrop, y_ref, atol=1e-4, rtol=1e-4))

    # --- single stochastic forward (DropoutWrapper semantics) ---------------
    y = dropout_wrapper_forward(x, prepared, d_out_real,
                                dropout_rate=0.5, seed=42)
    y = jax.block_until_ready(y)
    assert y.shape == (batch, d_out), y.shape
    assert bool(jnp.all(jnp.isfinite(y)))

    # --- batched MC-dropout sampling (gridded, parallel over samples) -------
    num_samples = 4
    ys = mc_dropout_forward(x, prepared, d_out_real,
                            dropout_rate=0.5, seed=42, num_samples=num_samples)
    ys = jax.block_until_ready(ys)
    assert ys.shape == (num_samples, batch, d_out), ys.shape
    assert bool(jnp.all(jnp.isfinite(ys)))
    # distinct samples must see distinct dropout masks
    assert not bool(jnp.allclose(ys[0], ys[1]))

    print("KERNEL_OK")
</pallas_src>

<mosaic_0001>
module attributes {stable_mosaic.version = 11 : i64} {
  func.func @_fused_mlp_kernel(%arg0: i32, %arg1: memref<1xi32, #tpu.memory_space<smem>>, %arg2: memref<8x32xf32, #tpu.memory_space<vmem>>, %arg3: memref<32x128xf32, #tpu.memory_space<vmem>>, %arg4: memref<1x128xf32, #tpu.memory_space<vmem>>, %arg5: memref<128x128xf32, #tpu.memory_space<vmem>>, %arg6: memref<1x128xf32, #tpu.memory_space<vmem>>, %arg7: memref<128x128xf32, #tpu.memory_space<vmem>>, %arg8: memref<1x128xf32, #tpu.memory_space<vmem>>, %arg9: memref<1x8x128xf32, #tpu.memory_space<vmem>>) attributes {dimension_semantics = [#tpu.dimension_semantics<parallel>], iteration_bounds = array<i64: 1>, scalar_prefetch = 1 : i64, scratch_operands = 0 : i64, tpu.core_type = #tpu.core_type<tc>, window_params = [{pipeline_mode = #tpu.pipeline_mode<synchronous>, transform_indices = @transform_0, window_bounds = array<i64: 8, 32>}, {pipeline_mode = #tpu.pipeline_mode<synchronous>, transform_indices = @transform_1, window_bounds = array<i64: 32, 128>}, {pipeline_mode = #tpu.pipeline_mode<synchronous>, transform_indices = @transform_2, window_bounds = array<i64: 1, 128>}, {pipeline_mode = #tpu.pipeline_mode<synchronous>, transform_indices = @transform_3, window_bounds = array<i64: 128, 128>}, {pipeline_mode = #tpu.pipeline_mode<synchronous>, transform_indices = @transform_4, window_bounds = array<i64: 1, 128>}, {pipeline_mode = #tpu.pipeline_mode<synchronous>, transform_indices = @transform_5, window_bounds = array<i64: 128, 128>}, {pipeline_mode = #tpu.pipeline_mode<synchronous>, transform_indices = @transform_6, window_bounds = array<i64: 1, 128>}, {transform_indices = @transform_7, window_bounds = array<i64: 1, 8, 128>}]} {
    %c0 = arith.constant 0 : index
    %c0_0 = arith.constant 0 : index
    %0 = vector.load %arg2[%c0, %c0_0] : memref<8x32xf32, #tpu.memory_space<vmem>>, vector<8x32xf32>
    %c0_1 = arith.constant 0 : index
    %c0_2 = arith.constant 0 : index
    %1 = vector.load %arg3[%c0_1, %c0_2] : memref<32x128xf32, #tpu.memory_space<vmem>>, vector<32x128xf32>
    %cst = arith.constant dense<0.000000e+00> : vector<8x128xf32>
    %2 = tpu.matmul %0, %1, %cst {dimension_numbers = #tpu.dot_dimension_numbers<[1], [0], [0], [1], [0, 0, 1, 1], [], []>} : vector<8x32xf32>, vector<32x128xf32>, vector<8x128xf32> -> vector<8x128xf32>
    %c0_3 = arith.constant 0 : index
    %c0_4 = arith.constant 0 : index
    %3 = vector.load %arg4[%c0_3, %c0_4] : memref<1x128xf32, #tpu.memory_space<vmem>>, vector<1x128xf32>
    %4 = vector.broadcast %3 : vector<1x128xf32> to vector<8x128xf32>
    %5 = arith.addf %2, %4 : vector<8x128xf32>
    %cst_5 = arith.constant 0.000000e+00 : f32
    %6 = vector.broadcast %cst_5 : f32 to vector<8x128xf32>
    %7 = arith.maximumf %5, %6 : vector<8x128xf32>
    %c0_6 = arith.constant 0 : index
    %c0_7 = arith.constant 0 : index
    %8 = vector.load %arg5[%c0_6, %c0_7] : memref<128x128xf32, #tpu.memory_space<vmem>>, vector<128x128xf32>
    %cst_8 = arith.constant dense<0.000000e+00> : vector<8x128xf32>
    %9 = tpu.matmul %7, %8, %cst_8 {dimension_numbers = #tpu.dot_dimension_numbers<[1], [0], [0], [1], [0, 0, 1, 1], [], []>} : vector<8x128xf32>, vector<128x128xf32>, vector<8x128xf32> -> vector<8x128xf32>
    %c0_9 = arith.constant 0 : index
    %c0_10 = arith.constant 0 : index
    %10 = vector.load %arg6[%c0_9, %c0_10] : memref<1x128xf32, #tpu.memory_space<vmem>>, vector<1x128xf32>
    %11 = vector.broadcast %10 : vector<1x128xf32> to vector<8x128xf32>
    %12 = arith.addf %9, %11 : vector<8x128xf32>
    %cst_11 = arith.constant 0.000000e+00 : f32
    %13 = vector.broadcast %cst_11 : f32 to vector<8x128xf32>
    %14 = arith.maximumf %12, %13 : vector<8x128xf32>
    %c0_12 = arith.constant 0 : index
    %c0_13 = arith.constant 0 : index
    %15 = vector.load %arg7[%c0_12, %c0_13] : memref<128x128xf32, #tpu.memory_space<vmem>>, vector<128x128xf32>
    %cst_14 = arith.constant dense<0.000000e+00> : vector<8x128xf32>
    %16 = tpu.matmul %14, %15, %cst_14 {dimension_numbers = #tpu.dot_dimension_numbers<[1], [0], [0], [1], [0, 0, 1, 1], [], []>} : vector<8x128xf32>, vector<128x128xf32>, vector<8x128xf32> -> vector<8x128xf32>
    %c0_15 = arith.constant 0 : index
    %c0_16 = arith.constant 0 : index
    %17 = vector.load %arg8[%c0_15, %c0_16] : memref<1x128xf32, #tpu.memory_space<vmem>>, vector<1x128xf32>
    %18 = vector.broadcast %17 : vector<1x128xf32> to vector<8x128xf32>
    %19 = arith.addf %16, %18 : vector<8x128xf32>
    %20 = vector.shape_cast %19 : vector<8x128xf32> to vector<1x8x128xf32>
    %c0_17 = arith.constant 0 : index
    %c0_18 = arith.constant 0 : index
    %c0_19 = arith.constant 0 : index
    %21 = vector.load %arg9[%c0_17, %c0_18, %c0_19] : memref<1x8x128xf32, #tpu.memory_space<vmem>>, vector<1x8x128xf32>
    tpu.vector_store %arg9[%c0_17, %c0_18, %c0_19], %20 {strides = array<i32>} : memref<1x8x128xf32, #tpu.memory_space<vmem>>, vector<1x8x128xf32>,
    return
  }
  func.func @transform_0(%arg0: i32, %arg1: memref<1xi32, #tpu.memory_space<smem>>) -> (i32, i32) {
    %c0_i32 = arith.constant 0 : i32
    %c0_i32_0 = arith.constant 0 : i32
    %c0_i32_1 = arith.constant 0 : i32
    return %c0_i32, %c0_i32_0 : i32, i32
  }
  func.func @transform_1(%arg0: i32, %arg1: memref<1xi32, #tpu.memory_space<smem>>) -> (i32, i32) {
    %c0_i32 = arith.constant 0 : i32
    %c0_i32_0 = arith.constant 0 : i32
    %c0_i32_1 = arith.constant 0 : i32
    return %c0_i32, %c0_i32_0 : i32, i32
  }
  func.func @transform_2(%arg0: i32, %arg1: memref<1xi32, #tpu.memory_space<smem>>) -> (i32, i32) {
    %c0_i32 = arith.constant 0 : i32
    %c0_i32_0 = arith.constant 0 : i32
    %c0_i32_1 = arith.constant 0 : i32
    return %c0_i32, %c0_i32_0 : i32, i32
  }
  func.func @transform_3(%arg0: i32, %arg1: memref<1xi32, #tpu.memory_space<smem>>) -> (i32, i32) {
    %c0_i32 = arith.constant 0 : i32
    %c0_i32_0 = arith.constant 0 : i32
    %c0_i32_1 = arith.constant 0 : i32
    return %c0_i32, %c0_i32_0 : i32, i32
  }
  func.func @transform_4(%arg0: i32, %arg1: memref<1xi32, #tpu.memory_space<smem>>) -> (i32, i32) {
    %c0_i32 = arith.constant 0 : i32
    %c0_i32_0 = arith.constant 0 : i32
    %c0_i32_1 = arith.constant 0 : i32
    return %c0_i32, %c0_i32_0 : i32, i32
  }
  func.func @transform_5(%arg0: i32, %arg1: memref<1xi32, #tpu.memory_space<smem>>) -> (i32, i32) {
    %c0_i32 = arith.constant 0 : i32
    %c0_i32_0 = arith.constant 0 : i32
    %c0_i32_1 = arith.constant 0 : i32
    return %c0_i32, %c0_i32_0 : i32, i32
  }
  func.func @transform_6(%arg0: i32, %arg1: memref<1xi32, #tpu.memory_space<smem>>) -> (i32, i32) {
    %c0_i32 = arith.constant 0 : i32
    %c0_i32_0 = arith.constant 0 : i32
    %c0_i32_1 = arith.constant 0 : i32
    return %c0_i32, %c0_i32_0 : i32, i32
  }
  func.func @transform_7(%arg0: i32, %arg1: memref<1xi32, #tpu.memory_space<smem>>) -> (i32, i32, i32) {
    %c0_i32 = arith.constant 0 : i32
    %c0_i32_0 = arith.constant 0 : i32
    %c0_i32_1 = arith.constant 0 : i32
    return %arg0, %c0_i32, %c0_i32_0 : i32, i32, i32
  }
}

</mosaic_0001>

<llo_original>
// kernel: tpu_custom_call.1
$region0: #{tpu_custom_call.1}
  #allocation0 [shape = 'u32[]', space=smem, size = 0x4, offset = 0x4, fixed_abs, tag = 'smem constant byte address 0x4 - core index']
  #allocation1 [shape = 'u32[144,128]{1,0:T(1,128)}', space=vmem, size = 0x12000, scoped, tag = 'internal scratch']
  #allocation2 [shape = 's32[1]{0}', space=sflag, size = 0x4, scoped, tag = 'scoped memory for tpu_custom_call.1']
  #allocation3 [shape = 's32[1]{0:T(128)S(6)}', space=smem, size = 0x200, scoped, tag = 'prefetched SMEM operand 0']
  %s0 = inlined_call_operand.<no memory space> [shape: s32[1], index: 0, kind: input, shape index: {}]
  %s1 = inlined_call_operand.hbm [shape: f32[8,32], index: 1, kind: input, shape index: {}]
  %s2 = inlined_call_operand.hbm [shape: f32[32,128], index: 2, kind: input, shape index: {}]
  %s3 = inlined_call_operand.vmem [shape: f32[1,128], index: 3, kind: input, shape index: {}]
  %s4 = inlined_call_operand.hbm [shape: f32[128,128], index: 4, kind: input, shape index: {}]
  %s5 = inlined_call_operand.vmem [shape: f32[1,128], index: 5, kind: input, shape index: {}]
  %s6 = inlined_call_operand.hbm [shape: f32[128,128], index: 6, kind: input, shape index: {}]
  %s7 = inlined_call_operand.vmem [shape: f32[1,128], index: 7, kind: input, shape index: {}]
  %s8 = inlined_call_operand.hbm [shape: f32[1,8,128], index: 8, kind: output, shape index: {}]
  %s9 = sld [smem:[#allocation0]]
  $region54: #{tpu_custom_call.1} parent=0
    _
  %s11 = ssub.s32 1, %s9
  %s12 = scalar_select 0, %s11, %s9
  %13 = sst [smem:[#allocation3]] %s0
  $region1: #{tpu_custom_call.1} parent=0
    #allocation4 [shape = 'u8[4096]{0}', space=vmem, size = 0x1000, scoped, tag = 'input window, operand 1, single buffered']
    #allocation5 [shape = 's32[1]{0}', space=sflag, size = 0x4, scoped, tag = 'scoped memory for tpu_custom_call.1']
    #allocation6 [shape = 's32[1]{0}', space=sflag, size = 0x4, scoped, tag = 'scoped memory for tpu_custom_call.1']
    #allocation7 [shape = 'u8[16384]{0}', space=vmem, size = 0x4000, scoped, tag = 'input window, operand 2, single buffered']
    #allocation8 [shape = 's32[1]{0}', space=sflag, size = 0x4, scoped, tag = 'scoped memory for tpu_custom_call.1']
    #allocation9 [shape = 'u8[65536]{0}', space=vmem, size = 0x10000, scoped, tag = 'input window, operand 4, single buffered']
    #allocation10 [shape = 'u8[65536]{0}', space=vmem, size = 0x10000, scoped, tag = 'input window, operand 6, single buffered']
    #allocation11 [shape = 's32[1]{0}', space=sflag, size = 0x4, scoped, tag = 'scoped memory for tpu_custom_call.1']
    #allocation12 [shape = 'u8[4096]{0}', space=vmem, size = 0x1000, scoped, tag = 'output window, operand 0, single buffered']
    %14 = vsyncpa [#allocation5], 0
    %15 = vsyncpa [#allocation8], 0
    %16 = vsyncpa [#allocation11], 0
    %17 = vsyncpa [#allocation6], 0
    // Predicated region
    $region2: #{tpu_custom_call.1} parent=1 // pred_check
      _
    $region3: #{tpu_custom_call.1} parent=1 // pred_check_branch
      %19 = sbr.rel (0) target = $region5
    $region4: #{tpu_custom_call.1} parent=1 // pred_region
      %s21 = ssub.s32 128, 128
      %22 = vsyncadd [#allocation5], %s21
      %s24 = sshll.u32 [#allocation4], 4
      %s25 = int_to_ptr.vmem [resolvable:$true] %s24
      %27 = dma.hbm_to_vmem [thread:$0]  %s1, 128, %s25, [#allocation5]
    $region5: #{tpu_custom_call.1} parent=1 // pred_fallthru
      _
    // Predicated region
    $region6: #{tpu_custom_call.1} parent=1 // pred_check
      _
    $region7: #{tpu_custom_call.1} parent=1 // pred_check_branch
      %29 = sbr.rel (0) target = $region9
    $region8: #{tpu_custom_call.1} parent=1 // pred_region
      %s31 = ssub.s32 512, 512
      %32 = vsyncadd [#allocation8], %s31
      %s33 = sshll.u32 [#allocation7], 4
      %s34 = int_to_ptr.vmem [resolvable:$true] %s33
      %39 = dma.hbm_to_vmem [thread:$0]  %s2, 512, %s34, [#allocation8], 128, 128, 8
    $region9: #{tpu_custom_call.1} parent=1 // pred_fallthru
      _
    // Predicated region
    $region10: #{tpu_custom_call.1} parent=1 // pred_check
      _
    $region11: #{tpu_custom_call.1} parent=1 // pred_check_branch
      %41 = sbr.rel (0) target = $region13
    $region12: #{tpu_custom_call.1} parent=1 // pred_region
      _
    $region13: #{tpu_custom_call.1} parent=1 // pred_fallthru
      _
    // Predicated region
    $region14: #{tpu_custom_call.1} parent=1 // pred_check
      _
    $region15: #{tpu_custom_call.1} parent=1 // pred_check_branch
      %43 = sbr.rel (0) target = $region17
    $region16: #{tpu_custom_call.1} parent=1 // pred_region
      %s45 = ssub.s32 2048, 2048
      %46 = vsyncadd [#allocation8], %s45
      %s47 = sshll.u32 [#allocation9], 4
      %s48 = int_to_ptr.vmem [resolvable:$true] %s47
      %53 = dma.hbm_to_vmem [thread:$0]  %s4, 2048, %s48, [#allocation8], 128, 128, 8
    $region17: #{tpu_custom_call.1} parent=1 // pred_fallthru
      _
    // Predicated region
    $region18: #{tpu_custom_call.1} parent=1 // pred_check
      _
    $region19: #{tpu_custom_call.1} parent=1 // pred_check_branch
      %55 = sbr.rel (0) target = $region21
    $region20: #{tpu_custom_call.1} parent=1 // pred_region
      _
    $region21: #{tpu_custom_call.1} parent=1 // pred_fallthru
      _
    // Predicated region
    $region22: #{tpu_custom_call.1} parent=1 // pred_check
      _
    $region23: #{tpu_custom_call.1} parent=1 // pred_check_branch
      %57 = sbr.rel (0) target = $region25
    $region24: #{tpu_custom_call.1} parent=1 // pred_region
      %s59 = ssub.s32 2048, 2048
      %60 = vsyncadd [#allocation11], %s59
      %s61 = sshll.u32 [#allocation10], 4
      %s62 = int_to_ptr.vmem [resolvable:$true] %s61
      %67 = dma.hbm_to_vmem [thread:$0]  %s6, 2048, %s62, [#allocation11], 128, 128, 8
    $region25: #{tpu_custom_call.1} parent=1 // pred_fallthru
      _
    // Predicated region
    $region26: #{tpu_custom_call.1} parent=1 // pred_check
      _
    $region27: #{tpu_custom_call.1} parent=1 // pred_check_branch
      %69 = sbr.rel (0) target = $region29
    $region28: #{tpu_custom_call.1} parent=1 // pred_region
      _
    $region29: #{tpu_custom_call.1} parent=1 // pred_fallthru
      _
    // Predicated region
    $region30: #{tpu_custom_call.1} parent=1 // pred_check
      _
    $region31: #{tpu_custom_call.1} parent=1 // pred_check_branch
      %71 = sbr.rel (0) target = $region33
    $region32: #{tpu_custom_call.1} parent=1 // pred_region
      %72 = dma.done [#allocation5], 128
    $region33: #{tpu_custom_call.1} parent=1 // pred_fallthru
      _
    // Predicated region
    $region34: #{tpu_custom_call.1} parent=1 // pred_check
      _
    $region35: #{tpu_custom_call.1} parent=1 // pred_check_branch
      %74 = sbr.rel (0) target = $region37
    $region36: #{tpu_custom_call.1} parent=1 // pred_region
      %75 = dma.done [#allocation8], 512
    $region37: #{tpu_custom_call.1} parent=1 // pred_fallthru
      _
    // Predicated region
    $region38: #{tpu_custom_call.1} parent=1 // pred_check
      _
    $region39: #{tpu_custom_call.1} parent=1 // pred_check_branch
      %77 = sbr.rel (0) target = $region41
    $region40: #{tpu_custom_call.1} parent=1 // pred_region
      %78 = dma.done [#allocation8], 2048
    $region41: #{tpu_custom_call.1} parent=1 // pred_fallthru
      _
    // Predicated region
    $region42: #{tpu_custom_call.1} parent=1 // pred_check
      _
    $region43: #{tpu_custom_call.1} parent=1 // pred_check_branch
      %80 = sbr.rel (0) target = $region45
    $region44: #{tpu_custom_call.1} parent=1 // pred_region
      %81 = dma.done [#allocation11], 2048
    $region45: #{tpu_custom_call.1} parent=1 // pred_fallthru
      _
    %v82 = vld [vmem:[#allocation4] sm:$0xff]
    %v83 = vld [vmem:[#allocation7] sm:$0xff]
    %v84 = vld [vmem:[#allocation7 + $0x8] sm:$0xff]
    %v85 = vld [vmem:[#allocation7 + $0x10] sm:$0xff]
    %v86 = vld [vmem:[#allocation7 + $0x18] sm:$0xff]
    %v87 = vld [vmem:[%s3] sm:$0x1]
    %v89 = vlaneseq
    %v90 = vshrl.u32 %v89, 7
    %v91 = vsub.s32 0, %v90
    %v92 = vrot.slane %v87, %v91
    %vm94 = vcmask 261120
    %v96 = vsel %vm94, %v82, 0
    %98 = vmatprep.subr.mxu0 0.0
    %99 = vmatpush1.msra.mxu0 0.0
    %100 = vmatprep.subr.mxu0 0.0
    %101 = vmatpush1.msra.mxu0 0.0
    %102 = vmatprep.subr.mxu0 0.0
    %103 = vmatpush1.msra.mxu0 0.0
    %104 = vmatprep.subr.mxu0 0.0
    %105 = vmatpush1.msra.mxu0 0.0
    %106 = vmatprep.subr.mxu0 0.0
    %107 = vmatpush1.msra.mxu0 0.0
    %108 = vmatprep.subr.mxu0 0.0
    %109 = vmatpush1.msra.mxu0 0.0
    %110 = vmatprep.subr.mxu0 0.0
    %111 = vmatpush1.msra.mxu0 0.0
    %112 = vmatprep.subr.mxu0 0.0
    %113 = vmatpush1.msra.mxu0 0.0
    %114 = vmatprep.subr.mxu0 0.0
    %115 = vmatpush1.msra.mxu0 0.0
    %116 = vmatprep.subr.mxu0 0.0
    %117 = vmatpush1.msra.mxu0 0.0
    %118 = vmatprep.subr.mxu0 0.0
    %119 = vmatpush1.msra.mxu0 0.0
    %120 = vmatprep.subr.mxu0 0.0
    %121 = vmatpush1.msra.mxu0 0.0
    %122 = vmatprep.subr.mxu0 0.0
    %123 = vmatpush1.msra.mxu0 %v86
    %124 = vmatprep.subr.mxu0 0.0
    %125 = vmatpush1.msra.mxu0 %v85
    %126 = vmatprep.subr.mxu0 0.0
    %127 = vmatpush1.msra.mxu0 %v84
    %128 = vmatprep.subr.mxu0 0.0
    %129 = vmatpush1.msra.mxu0 %v83
    %130 = vmatprep.subr.mxu0 0.0
    %131 = vmatpush2.msra.mxu0 0.0
    %132 = vmatprep.subr.mxu0 0.0
    %133 = vmatpush2.msra.mxu0 0.0
    %134 = vmatprep.subr.mxu0 0.0
    %135 = vmatpush2.msra.mxu0 0.0
    %136 = vmatprep.subr.mxu0 0.0
    %137 = vmatpush2.msra.mxu0 0.0
    %138 = vmatprep.subr.mxu0 0.0
    %139 = vmatpush2.msra.mxu0 0.0
    %140 = vmatprep.subr.mxu0 0.0
    %141 = vmatpush2.msra.mxu0 0.0
    %142 = vmatprep.subr.mxu0 0.0
    %143 = vmatpush2.msra.mxu0 0.0
    %144 = vmatprep.subr.mxu0 0.0
    %145 = vmatpush2.msra.mxu0 0.0
    %146 = vmatprep.subr.mxu0 0.0
    %147 = vmatpush2.msra.mxu0 0.0
    %148 = vmatprep.subr.mxu0 0.0
    %149 = vmatpush2.msra.mxu0 0.0
    %150 = vmatprep.subr.mxu0 0.0
    %151 = vmatpush2.msra.mxu0 0.0
    %152 = vmatprep.subr.mxu0 0.0
    %153 = vmatpush2.msra.mxu0 0.0
    %154 = vmatprep.subr.mxu0 0.0
    %155 = vmatpush2.msra.mxu0 0.0
    %156 = vmatprep.subr.mxu0 0.0
    %157 = vmatpush2.msra.mxu0 0.0
    %158 = vmatprep.subr.mxu0 0.0
    %159 = vmatpush2.msra.mxu0 0.0
    %160 = vmatprep.subr.mxu0 0.0
    %161 = vmatpush2.msra.mxu0 0.0
    %162 = vmatprep.mubr.f32.mxu0 0.0
    %163 = vmatmul.mubr.f32.gmra.mxu0 %v96
    %v164 = vpop.f32.mrf.mxu0
    %v165 = vadd.f32 %v92, %v164
    %v166 = vpop.f32.mrf.mxu0
    %167 = vdwg.mxu0
    %v168 = vmax.f32 %v165, 0.0
    %v169 = vld [vmem:[#allocation9] sm:$0xff]
    %v170 = vld [vmem:[#allocation9 + $0x8] sm:$0xff]
    %v171 = vld [vmem:[#allocation9 + $0x10] sm:$0xff]
    %v172 = vld [vmem:[#allocation9 + $0x18] sm:$0xff]
    %v173 = vld [vmem:[#allocation9 + $0x20] sm:$0xff]
    %v174 = vld [vmem:[#allocation9 + $0x28] sm:$0xff]
    %v175 = vld [vmem:[#allocation9 + $0x30] sm:$0xff]
    %v176 = vld [vmem:[#allocation9 + $0x38] sm:$0xff]
    %v177 = vld [vmem:[#allocation9 + $0x40] sm:$0xff]
    %v178 = vld [vmem:[#allocation9 + $0x48] sm:$0xff]
    %v179 = vld [vmem:[#allocation9 + $0x50] sm:$0xff]
    %v180 = vld [vmem:[#allocation9 + $0x58] sm:$0xff]
    %v181 = vld [vmem:[#allocation9 + $0x60] sm:$0xff]
    %v182 = vld [vmem:[#allocation9 + $0x68] sm:$0xff]
    %v183 = vld [vmem:[#allocation9 + $0x70] sm:$0xff]
    %v184 = vld [vmem:[#allocation9 + $0x78] sm:$0xff]
    %v185 = vld [vmem:[%s5] sm:$0x1]
    %v187 = vlaneseq
    %v188 = vshrl.u32 %v187, 7
    %v189 = vsub.s32 0, %v188
    %v190 = vrot.slane %v185, %v189
    %192 = vmatprep.subr.mxu0 0.0
    %193 = vmatpush1.msra.mxu0 %v184
    %194 = vmatprep.subr.mxu0 0.0
    %195 = vmatpush1.msra.mxu0 %v183
    %196 = vmatprep.subr.mxu0 0.0
    %197 = vmatpush1.msra.mxu0 %v182
    %198 = vmatprep.subr.mxu0 0.0
    %199 = vmatpush1.msra.mxu0 %v181
    %200 = vmatprep.subr.mxu0 0.0
    %201 = vmatpush1.msra.mxu0 %v180
    %202 = vmatprep.subr.mxu0 0.0
    %203 = vmatpush1.msra.mxu0 %v179
    %204 = vmatprep.subr.mxu0 0.0
    %205 = vmatpush1.msra.mxu0 %v178
    %206 = vmatprep.subr.mxu0 0.0
    %207 = vmatpush1.msra.mxu0 %v177
    %208 = vmatprep.subr.mxu0 0.0
    %209 = vmatpush1.msra.mxu0 %v176
    %210 = vmatprep.subr.mxu0 0.0
    %211 = vmatpush1.msra.mxu0 %v175
    %212 = vmatprep.subr.mxu0 0.0
    %213 = vmatpush1.msra.mxu0 %v174
    %214 = vmatprep.subr.mxu0 0.0
    %215 = vmatpush1.msra.mxu0 %v173
    %216 = vmatprep.subr.mxu0 0.0
    %217 = vmatpush1.msra.mxu0 %v172
    %218 = vmatprep.subr.mxu0 0.0
    %219 = vmatpush1.msra.mxu0 %v171
    %220 = vmatprep.subr.mxu0 0.0
    %221 = vmatpush1.msra.mxu0 %v170
    %222 = vmatprep.subr.mxu0 0.0
    %223 = vmatpush1.msra.mxu0 %v169
    %224 = vmatprep.subr.mxu0 0.0
    %225 = vmatpush2.msra.mxu0 0.0
    %226 = vmatprep.subr.mxu0 0.0
    %227 = vmatpush2.msra.mxu0 0.0
    %228 = vmatprep.subr.mxu0 0.0
    %229 = vmatpush2.msra.mxu0 0.0
    %230 = vmatprep.subr.mxu0 0.0
    %231 = vmatpush2.msra.mxu0 0.0
    %232 = vmatprep.subr.mxu0 0.0
    %233 = vmatpush2.msra.mxu0 0.0
    %234 = vmatprep.subr.mxu0 0.0
    %235 = vmatpush2.msra.mxu0 0.0
    %236 = vmatprep.subr.mxu0 0.0
    %237 = vmatpush2.msra.mxu0 0.0
    %238 = vmatprep.subr.mxu0 0.0
    %239 = vmatpush2.msra.mxu0 0.0
    %240 = vmatprep.subr.mxu0 0.0
    %241 = vmatpush2.msra.mxu0 0.0
    %242 = vmatprep.subr.mxu0 0.0
    %243 = vmatpush2.msra.mxu0 0.0
    %244 = vmatprep.subr.mxu0 0.0
    %245 = vmatpush2.msra.mxu0 0.0
    %246 = vmatprep.subr.mxu0 0.0
    %247 = vmatpush2.msra.mxu0 0.0
    %248 = vmatprep.subr.mxu0 0.0
    %249 = vmatpush2.msra.mxu0 0.0
    %250 = vmatprep.subr.mxu0 0.0
    %251 = vmatpush2.msra.mxu0 0.0
    %252 = vmatprep.subr.mxu0 0.0
    %253 = vmatpush2.msra.mxu0 0.0
    %254 = vmatprep.subr.mxu0 0.0
    %255 = vmatpush2.msra.mxu0 0.0
    %256 = vmatprep.mubr.f32.mxu0 0.0
    %257 = vmatmul.mubr.f32.gmra.mxu0 %v168
    %v258 = vpop.f32.mrf.mxu0
    %v259 = vadd.f32 %v190, %v258
    %v260 = vpop.f32.mrf.mxu0
    %261 = vdwg.mxu0
    %v262 = vmax.f32 %v259, 0.0
    %v263 = vld [vmem:[#allocation10] sm:$0xff]
    %v264 = vld [vmem:[#allocation10 + $0x8] sm:$0xff]
    %v265 = vld [vmem:[#allocation10 + $0x10] sm:$0xff]
    %v266 = vld [vmem:[#allocation10 + $0x18] sm:$0xff]
    %v267 = vld [vmem:[#allocation10 + $0x20] sm:$0xff]
    %v268 = vld [vmem:[#allocation10 + $0x28] sm:$0xff]
    %v269 = vld [vmem:[#allocation10 + $0x30] sm:$0xff]
    %v270 = vld [vmem:[#allocation10 + $0x38] sm:$0xff]
    %v271 = vld [vmem:[#allocation10 + $0x40] sm:$0xff]
    %v272 = vld [vmem:[#allocation10 + $0x48] sm:$0xff]
    %v273 = vld [vmem:[#allocation10 + $0x50] sm:$0xff]
    %v274 = vld [vmem:[#allocation10 + $0x58] sm:$0xff]
    %v275 = vld [vmem:[#allocation10 + $0x60] sm:$0xff]
    %v276 = vld [vmem:[#allocation10 + $0x68] sm:$0xff]
    %v277 = vld [vmem:[#allocation10 + $0x70] sm:$0xff]
    %v278 = vld [vmem:[#allocation10 + $0x78] sm:$0xff]
    %v279 = vld [vmem:[%s7] sm:$0x1]
    %v281 = vlaneseq
    %v282 = vshrl.u32 %v281, 7
    %v283 = vsub.s32 0, %v282
    %v284 = vrot.slane %v279, %v283
    %286 = vmatprep.subr.mxu0 0.0
    %287 = vmatpush1.msra.mxu0 %v278
    %288 = vmatprep.subr.mxu0 0.0
    %289 = vmatpush1.msra.mxu0 %v277
    %290 = vmatprep.subr.mxu0 0.0
    %291 = vmatpush1.msra.mxu0 %v276
    %292 = vmatprep.subr.mxu0 0.0
    %293 = vmatpush1.msra.mxu0 %v275
    %294 = vmatprep.subr.mxu0 0.0
    %295 = vmatpush1.msra.mxu0 %v274
    %296 = vmatprep.subr.mxu0 0.0
    %297 = vmatpush1.msra.mxu0 %v273
    %298 = vmatprep.subr.mxu0 0.0
    %299 = vmatpush1.msra.mxu0 %v272
    %300 = vmatprep.subr.mxu0 0.0
    %301 = vmatpush1.msra.mxu0 %v271
    %302 = vmatprep.subr.mxu0 0.0
    %303 = vmatpush1.msra.mxu0 %v270
    %304 = vmatprep.subr.mxu0 0.0
    %305 = vmatpush1.msra.mxu0 %v269
    %306 = vmatprep.subr.mxu0 0.0
    %307 = vmatpush1.msra.mxu0 %v268
    %308 = vmatprep.subr.mxu0 0.0
    %309 = vmatpush1.msra.mxu0 %v267
    %310 = vmatprep.subr.mxu0 0.0
    %311 = vmatpush1.msra.mxu0 %v266
    %312 = vmatprep.subr.mxu0 0.0
    %313 = vmatpush1.msra.mxu0 %v265
    %314 = vmatprep.subr.mxu0 0.0
    %315 = vmatpush1.msra.mxu0 %v264
    %316 = vmatprep.subr.mxu0 0.0
    %317 = vmatpush1.msra.mxu0 %v263
    %318 = vmatprep.subr.mxu0 0.0
    %319 = vmatpush2.msra.mxu0 0.0
    %320 = vmatprep.subr.mxu0 0.0
    %321 = vmatpush2.msra.mxu0 0.0
    %322 = vmatprep.subr.mxu0 0.0
    %323 = vmatpush2.msra.mxu0 0.0
    %324 = vmatprep.subr.mxu0 0.0
    %325 = vmatpush2.msra.mxu0 0.0
    %326 = vmatprep.subr.mxu0 0.0
    %327 = vmatpush2.msra.mxu0 0.0
    %328 = vmatprep.subr.mxu0 0.0
    %329 = vmatpush2.msra.mxu0 0.0
    %330 = vmatprep.subr.mxu0 0.0
    %331 = vmatpush2.msra.mxu0 0.0
    %332 = vmatprep.subr.mxu0 0.0
    %333 = vmatpush2.msra.mxu0 0.0
    %334 = vmatprep.subr.mxu0 0.0
    %335 = vmatpush2.msra.mxu0 0.0
    %336 = vmatprep.subr.mxu0 0.0
    %337 = vmatpush2.msra.mxu0 0.0
    %338 = vmatprep.subr.mxu0 0.0
    %339 = vmatpush2.msra.mxu0 0.0
    %340 = vmatprep.subr.mxu0 0.0
    %341 = vmatpush2.msra.mxu0 0.0
    %342 = vmatprep.subr.mxu0 0.0
    %343 = vmatpush2.msra.mxu0 0.0
    %344 = vmatprep.subr.mxu0 0.0
    %345 = vmatpush2.msra.mxu0 0.0
    %346 = vmatprep.subr.mxu0 0.0
    %347 = vmatpush2.msra.mxu0 0.0
    %348 = vmatprep.subr.mxu0 0.0
    %349 = vmatpush2.msra.mxu0 0.0
    %350 = vmatprep.mubr.f32.mxu0 0.0
    %351 = vmatmul.mubr.f32.gmra.mxu0 %v262
    %v352 = vpop.f32.mrf.mxu0
    %v353 = vadd.f32 %v284, %v352
    %v354 = vpop.f32.mrf.mxu0
    %355 = vdwg.mxu0
    %356 = vst [vmem:[#allocation12] sm:$0xff] %v353
    // Predicated region
    $region46: #{tpu_custom_call.1} parent=1 // pred_check
      _
    $region47: #{tpu_custom_call.1} parent=1 // pred_check_branch
      %358 = sbr.rel (0) target = $region49
    $region48: #{tpu_custom_call.1} parent=1 // pred_region
      %s360 = ssub.s32 128, 128
      %361 = vsyncadd [#allocation6], %s360
      %s363 = sshll.u32 [#allocation12], 4
      %s364 = int_to_ptr.vmem [resolvable:$true] %s363
      %366 = dma.vmem_to_hbm [thread:$0]  %s364, 128, %s8, [#allocation6]
    $region49: #{tpu_custom_call.1} parent=1 // pred_fallthru
      _
    // Predicated region
    $region50: #{tpu_custom_call.1} parent=1 // pred_check
      _
    $region51: #{tpu_custom_call.1} parent=1 // pred_check_branch
      %368 = sbr.rel (0) target = $region53
    $region52: #{tpu_custom_call.1} parent=1 // pred_region
      %369 = dma.done [#allocation6], 128
    $region53: #{tpu_custom_call.1} parent=1 // pred_fallthru
      _
    %370 = vsyncpa [#allocation5], 1
    %371 = vsyncpa [#allocation8], 1
    %372 = vsyncpa [#allocation11], 1
    %373 = vsyncpa [#allocation6], 1

</llo_original>
